<compile_context>
chip_gen: v7x
topology: tpu7x:2x2x1
jax: 0.10.0
libtpu: 0.0.40
codegen_flags: <defaults>
</compile_context>

<pallas_src>
import functools
import math

import jax
import jax.numpy as jnp
from jax.experimental import pallas as pl
from jax.experimental.pallas import tpu as pltpu


_LANE = 128
_SUBLANE = 8
_BLOCK_BYTES_MAX = 4 * 1024 * 1024   # per input per block (dtype-aware)
_ROW_TILE_MAX = 128                  # bound on rows per block
_SPLIT_MIN_BYTES = 1 * 1024 * 1024   # force 2-way parallel col split above this
_VMEM_LIMIT = 32 * 1024 * 1024       # safe on v5e/v6e/v7x


# ---------------------------------------------------------------------------
# Kernel: accumulate the elementwise loss of one (tr, tn) block into the
# resident lane-dense (tr, 128) f32 output block.  grid = (R, P, Kp) with the
# last axis the reduction.  The block is processed 128-lane stripe by stripe.
# ---------------------------------------------------------------------------
def _loss_kernel(p_ref, a_ref, out_ref, *, kind, tn, kp, cols_valid, needs_mask):
    k = pl.program_id(2)

    @pl.when(k == 0)
    def _init():
        out_ref[...] = jnp.zeros_like(out_ref)

    # Global column offset of this block (p-th column group, k-th block).
    col0 = (pl.program_id(1) * kp + k) * tn
    n_stripes = tn // _LANE

    def accumulate(off):
        p = p_ref[:, pl.ds(off, _LANE)].astype(jnp.float32)
        a = a_ref[:, pl.ds(off, _LANE)].astype(jnp.float32)
        d = p - a
        if kind == "sq":                       # mse & gaussian_likelihood
            e = d * d
        elif kind == "mae":
            e = jnp.abs(d)
        elif kind == "smoothL1":               # torch default beta = 1.0
            ad = jnp.abs(d)
            e = jnp.where(ad < 1.0, 0.5 * d * d, ad - 0.5)
        elif kind == "bce":                    # torch.nn.BCELoss clamps logs at -100
            logp = jnp.maximum(jnp.log(p), -100.0)
            log1mp = jnp.maximum(jnp.log(1.0 - p), -100.0)
            e = -(a * logp + (1.0 - a) * log1mp)
        else:
            raise ValueError(f"loss_fn kind {kind} not found")
        if needs_mask:
            # Zero out columns past the true feature width (pad data in the
            # boundary block is unspecified; select discards NaN/Inf safely).
            lane = jax.lax.broadcasted_iota(jnp.int32, e.shape, 1)
            e = jnp.where(lane + (col0 + off) < cols_valid, e, 0.0)
        out_ref[...] += e

    if n_stripes <= 16:
        # Short blocks: full static unroll.
        for i in range(n_stripes):
            accumulate(i * _LANE)
    else:
        # Long blocks: bounded fori_loop with modest unroll for ILP.
        def body(i, carry):
            accumulate(pl.multiple_of(i * _LANE, _LANE))
            return carry

        jax.lax.fori_loop(0, n_stripes, body, 0, unroll=8)


# ---------------------------------------------------------------------------
# Tiling helpers (all static, trace-time Python).
# ---------------------------------------------------------------------------
def _free_sublane_packing(B, N):
    """Largest S dividing N (free reshape) that makes B*S sublane-dense."""
    t = 8 // math.gcd(B, 8)
    while t > 1:
        if N % t == 0:
            return t
        t //= 2
    return 1


def _row_tile(rows):
    """Largest divisor of rows that is a multiple of 8 and <= _ROW_TILE_MAX."""
    if rows <= _ROW_TILE_MAX:
        return rows
    for d in range(_ROW_TILE_MAX - _ROW_TILE_MAX % _SUBLANE, 0, -_SUBLANE):
        if rows % d == 0:
            return d
    return rows                       # rows not divisible by 8: one row block


def _col_split(c128, tn128_max, want_two):
    """Return (P, Kp, tn128) covering c128 lane-stripes, no fully-OOB block."""
    if want_two and c128 >= 2:
        tn128 = min(tn128_max, -(-c128 // 2))
        while tn128 >= 1:
            kp = -(-c128 // (2 * tn128))
            if (2 * kp - 1) * tn128 < c128:   # last block is never fully OOB
                return 2, kp, tn128
            tn128 -= 1
    tn128 = max(1, min(tn128_max, c128))
    return 1, -(-c128 // tn128), tn128


# ---------------------------------------------------------------------------
# Wrapper: tiling, pallas_call, epilogue reductions.
# ---------------------------------------------------------------------------
def _per_batch_sums(p2, a2, kind):
    """Per-batch sum of the elementwise loss over the feature axis -> (B,) f32."""
    B, N = p2.shape

    # Free sublane packing (pure reshape, never a pad/copy).
    S = _free_sublane_packing(B, N)
    rows, cols = B * S, N // S
    pr = p2.reshape(rows, cols)        # native dtype; f32 cast happens on-chip
    ar = a2.reshape(rows, cols)

    itemsize = max(pr.dtype.itemsize, ar.dtype.itemsize)
    tr = _row_tile(rows)
    R = rows // tr

    c128 = -(-cols // _LANE)
    tn128_max = max(1, _BLOCK_BYTES_MAX // (tr * _LANE * itemsize))
    want_two = (R == 1) and (rows * cols * itemsize >= _SPLIT_MIN_BYTES)
    P, Kp, tn128 = _col_split(c128, tn128_max, want_two)
    tn = tn128 * _LANE
    needs_mask = (P * Kp * tn) != cols

    kernel = functools.partial(
        _loss_kernel, kind=kind, tn=tn, kp=Kp, cols_valid=cols,
        needs_mask=needs_mask)

    flops_per = {"sq": 3, "mae": 2, "smoothL1": 6, "bce": 8}[kind]
    cost = pl.CostEstimate(
        flops=flops_per * B * N,
        transcendentals=(2 * B * N) if kind == "bce" else 0,
        bytes_accessed=pr.size * pr.dtype.itemsize
        + ar.size * ar.dtype.itemsize + rows * P * _LANE * 4)

    partial = pl.pallas_call(
        kernel,
        out_shape=jax.ShapeDtypeStruct((rows, P * _LANE), jnp.float32),
        grid=(R, P, Kp),
        in_specs=[
            pl.BlockSpec((tr, tn), lambda r, p, k: (r, p * Kp + k)),
            pl.BlockSpec((tr, tn), lambda r, p, k: (r, p * Kp + k)),
        ],
        out_specs=pl.BlockSpec((tr, _LANE), lambda r, p, k: (r, p)),
        compiler_params=pltpu.CompilerParams(
            dimension_semantics=("parallel", "parallel", "arbitrary"),
            vmem_limit_bytes=_VMEM_LIMIT,
        ),
        cost_estimate=cost,
    )(pr, ar)

    # Epilogue reductions on a tiny (rows, P*128) f32 array.
    per_row = jnp.sum(partial, axis=1)                       # (rows,)
    return jnp.sum(per_row.reshape(B, S), axis=1)            # (B,)


class ReconstructionLoss:
    """JAX/Pallas port of the PyTorch ReconstructionLoss module (forward only)."""

    _KERNEL_KIND = {
        "mse": "sq",
        "gaussian_likelihood": "sq",
        "mae": "mae",
        "smoothL1": "smoothL1",
        "bce": "bce",
    }

    def __init__(self, cfg):
        self.loss_type = cfg["train"]["loss_fn"]
        if self.loss_type not in self._KERNEL_KIND:
            raise ValueError(f"loss_fn {self.loss_type} not found")
        if self.loss_type == "gaussian_likelihood":
            # TODO(synk): logscale is a trainable nn.Parameter in PyTorch; here it
            # is its initial value (0.0) used as a constant in the forward pass.
            self.logscale = jnp.zeros((1,), jnp.float32)

    def __call__(self, predict, actual):
        B = predict.shape[0]
        N = int(math.prod(predict.shape[1:]))
        p2 = predict.reshape(B, N)         # keep native dtype (bf16 stays bf16)
        a2 = actual.reshape(B, N)
        sums = _per_batch_sums(p2, a2, self._KERNEL_KIND[self.loss_type])
        if self.loss_type == "gaussian_likelihood":
            # log N(actual; mean=predict, scale=exp(logscale)).sum(dim=(1,2,3))
            logscale = self.logscale[0]
            inv_two_var = 0.5 * jnp.exp(-2.0 * logscale)
            const = logscale + 0.5 * jnp.log(2.0 * jnp.pi)
            return -sums * inv_two_var - N * const           # (B,)
        # mean-reduction losses -> scalar
        return jnp.sum(sums) / (B * N)


# ---------------------------------------------------------------------------
# Pure-JAX references for verification.
# ---------------------------------------------------------------------------
def _ref(predict, actual, loss_type, logscale=None):
    p = predict.astype(jnp.float32)
    a = actual.astype(jnp.float32)
    d = p - a
    if loss_type == "mse":
        return jnp.mean(d * d)
    if loss_type == "mae":
        return jnp.mean(jnp.abs(d))
    if loss_type == "smoothL1":
        ad = jnp.abs(d)
        return jnp.mean(jnp.where(ad < 1.0, 0.5 * d * d, ad - 0.5))
    if loss_type == "bce":
        logp = jnp.maximum(jnp.log(p), -100.0)
        log1mp = jnp.maximum(jnp.log(1.0 - p), -100.0)
        return jnp.mean(-(a * logp + (1.0 - a) * log1mp))
    if loss_type == "gaussian_likelihood":
        ls = logscale[0]
        scale = jnp.exp(ls)
        lp = -d * d / (2.0 * scale * scale) - ls - 0.5 * jnp.log(2.0 * jnp.pi)
        return jnp.sum(lp.reshape(p.shape[0], -1), axis=1)
    raise ValueError(loss_type)


if __name__ == "__main__":
    key = jax.random.PRNGKey(0)
    failures = []

    def run_case(shape, loss_types, dtype, rtol, atol, key):
        key, k1, k2 = jax.random.split(key, 3)
        predict = jax.random.normal(k1, shape, jnp.float32)
        actual = jax.random.normal(k2, shape, jnp.float32)
        predict01 = jax.nn.sigmoid(predict)     # BCE needs values in [0, 1]
        actual01 = jax.nn.sigmoid(actual)
        if dtype != jnp.float32:
            predict = predict.astype(dtype)
            actual = actual.astype(dtype)
            predict01 = predict01.astype(dtype)
            actual01 = actual01.astype(dtype)
        for loss_type in loss_types:
            mod = ReconstructionLoss({"train": {"loss_fn": loss_type}})
            p, a = (predict01, actual01) if loss_type == "bce" else (predict, actual)
            out = jax.block_until_ready(mod(p, a))
            ref = jax.block_until_ready(
                _ref(p, a, loss_type, getattr(mod, "logscale", None)))
            if not jnp.allclose(out, ref, rtol=rtol, atol=atol):
                failures.append(f"{loss_type} {shape} {jnp.dtype(dtype).name}: "
                                f"{out} vs {ref}")
        return key

    all_losses = ("mse", "mae", "smoothL1", "bce", "gaussian_likelihood")

    # Small shapes: single-block path and the masked (ragged feature) path.
    key = run_case((2, 4, 16, 16), all_losses, jnp.float32, 1e-4, 1e-4, key)
    key = run_case((3, 3, 15, 17), all_losses, jnp.float32, 1e-4, 1e-4, key)
    # Larger shapes: fori-loop stripe path, 2-way parallel column split
    # (v7x megacore) with a ragged tail, and the row-tiled batch path.
    key = run_case((4, 16, 127, 131), ("mse", "bce"), jnp.float32, 1e-3, 1e-3, key)
    key = run_case((256, 8, 16, 16), ("mse", "gaussian_likelihood"),
                   jnp.float32, 1e-3, 1e-3, key)
    # Native bf16 streaming (no wrapper upcast; f32 cast is on-chip).
    key = run_case((2, 4, 16, 16), ("mse", "mae"), jnp.bfloat16, 1e-3, 1e-3, key)

    if failures:
        for f in failures:
            print("MISMATCH", f)
    else:
        print("KERNEL_OK")
</pallas_src>

<mosaic_0001>
module attributes {stable_mosaic.version = 11 : i64} {
  func.func @_loss_kernel(%arg0: i32, %arg1: i32, %arg2: i32, %arg3: memref<8x256xf32, #tpu.memory_space<vmem>>, %arg4: memref<8x256xf32, #tpu.memory_space<vmem>>, %arg5: memref<8x128xf32, #tpu.memory_space<vmem>>) attributes {dimension_semantics = [#tpu.dimension_semantics<parallel>, #tpu.dimension_semantics<parallel>, #tpu.dimension_semantics<arbitrary>], iteration_bounds = array<i64: 1, 1, 1>, scalar_prefetch = 0 : i64, scratch_operands = 0 : i64, tpu.core_type = #tpu.core_type<tc>, window_params = [{transform_indices = @transform_0, window_bounds = array<i64: 8, 256>}, {transform_indices = @transform_1, window_bounds = array<i64: 8, 256>}, {transform_indices = @transform_2, window_bounds = array<i64: 8, 128>}]} {
    %c0_i32 = arith.constant 0 : i32
    %0 = arith.cmpi eq, %arg2, %c0_i32 : i32
    %1 = arith.extui %0 : i1 to i32
    %c0_i32_0 = arith.constant 0 : i32
    %2 = arith.cmpi ne, %1, %c0_i32_0 : i32
    scf.if %2 {
      %cst = arith.constant 0.000000e+00 : f32
      %17 = vector.broadcast %cst : f32 to vector<8x128xf32>
      %c0_15 = arith.constant 0 : index
      %c0_16 = arith.constant 0 : index
      %18 = vector.load %arg5[%c0_15, %c0_16] : memref<8x128xf32, #tpu.memory_space<vmem>>, vector<8x128xf32>
      tpu.vector_store %arg5[%c0_15, %c0_16], %17 {strides = array<i32>} : memref<8x128xf32, #tpu.memory_space<vmem>>, vector<8x128xf32>,
    } else {
    }
    %c0 = arith.constant 0 : index
    %c0_1 = arith.constant 0 : index
    %3 = vector.load %arg3[%c0, %c0_1] : memref<8x256xf32, #tpu.memory_space<vmem>>, vector<8x128xf32>
    %c0_2 = arith.constant 0 : index
    %c0_3 = arith.constant 0 : index
    %4 = vector.load %arg4[%c0_2, %c0_3] : memref<8x256xf32, #tpu.memory_space<vmem>>, vector<8x128xf32>
    %5 = arith.subf %3, %4 : vector<8x128xf32>
    %6 = arith.mulf %5, %5 : vector<8x128xf32>
    %c0_4 = arith.constant 0 : index
    %c0_5 = arith.constant 0 : index
    %7 = vector.load %arg5[%c0_4, %c0_5] : memref<8x128xf32, #tpu.memory_space<vmem>>, vector<8x128xf32>
    %8 = arith.addf %7, %6 : vector<8x128xf32>
    %c0_6 = arith.constant 0 : index
    %c0_7 = arith.constant 0 : index
    %9 = vector.load %arg5[%c0_6, %c0_7] : memref<8x128xf32, #tpu.memory_space<vmem>>, vector<8x128xf32>
    tpu.vector_store %arg5[%c0_6, %c0_7], %8 {strides = array<i32>} : memref<8x128xf32, #tpu.memory_space<vmem>>, vector<8x128xf32>,
    %c0_8 = arith.constant 0 : index
    %c128 = arith.constant 128 : index
    %10 = vector.load %arg3[%c0_8, %c128] : memref<8x256xf32, #tpu.memory_space<vmem>>, vector<8x128xf32>
    %c0_9 = arith.constant 0 : index
    %c128_10 = arith.constant 128 : index
    %11 = vector.load %arg4[%c0_9, %c128_10] : memref<8x256xf32, #tpu.memory_space<vmem>>, vector<8x128xf32>
    %12 = arith.subf %10, %11 : vector<8x128xf32>
    %13 = arith.mulf %12, %12 : vector<8x128xf32>
    %c0_11 = arith.constant 0 : index
    %c0_12 = arith.constant 0 : index
    %14 = vector.load %arg5[%c0_11, %c0_12] : memref<8x128xf32, #tpu.memory_space<vmem>>, vector<8x128xf32>
    %15 = arith.addf %14, %13 : vector<8x128xf32>
    %c0_13 = arith.constant 0 : index
    %c0_14 = arith.constant 0 : index
    %16 = vector.load %arg5[%c0_13, %c0_14] : memref<8x128xf32, #tpu.memory_space<vmem>>, vector<8x128xf32>
    tpu.vector_store %arg5[%c0_13, %c0_14], %15 {strides = array<i32>} : memref<8x128xf32, #tpu.memory_space<vmem>>, vector<8x128xf32>,
    return
  }
  func.func @transform_0(%arg0: i32, %arg1: i32, %arg2: i32) -> (i32, i32) {
    %c1_i32 = arith.constant 1 : i32
    %0 = arith.muli %arg1, %c1_i32 : i32
    %1 = arith.addi %0, %arg2 : i32
    %c0_i32 = arith.constant 0 : i32
    return %arg0, %1 : i32, i32
  }
  func.func @transform_1(%arg0: i32, %arg1: i32, %arg2: i32) -> (i32, i32) {
    %c1_i32 = arith.constant 1 : i32
    %0 = arith.muli %arg1, %c1_i32 : i32
    %1 = arith.addi %0, %arg2 : i32
    %c0_i32 = arith.constant 0 : i32
    return %arg0, %1 : i32, i32
  }
  func.func @transform_2(%arg0: i32, %arg1: i32, %arg2: i32) -> (i32, i32) {
    %c0_i32 = arith.constant 0 : i32
    return %arg0, %arg1 : i32, i32
  }
}

</mosaic_0001>

<llo_original>
// kernel: tpu_custom_call.1
$region0: #{tpu_custom_call.1}
  #allocation0 [shape = 'u32[]', space=smem, size = 0x4, offset = 0x4, fixed_abs, tag = 'smem constant byte address 0x4 - core index']
  #allocation1 [shape = 'u32[144,128]{1,0:T(1,128)}', space=vmem, size = 0x12000, scoped, tag = 'internal scratch']
  %s0 = inlined_call_operand.hbm [shape: f32[8,256], index: 0, kind: input, shape index: {}]
  %s1 = inlined_call_operand.hbm [shape: f32[8,256], index: 1, kind: input, shape index: {}]
  %s2 = inlined_call_operand.hbm [shape: f32[8,128], index: 2, kind: output, shape index: {}]
  %s3 = sld [smem:[#allocation0]]
  $region30: #{tpu_custom_call.1} parent=0
    _
  %s5 = ssub.s32 1, %s3
  %s6 = scalar_select 0, %s5, %s3
  $region1: #{tpu_custom_call.1} parent=0
    #allocation2 [shape = 'u8[8192]{0}', space=vmem, size = 0x2000, scoped, tag = 'input window, operand 0, single buffered']
    #allocation3 [shape = 's32[1]{0}', space=sflag, size = 0x4, scoped, tag = 'scoped memory for tpu_custom_call.1']
    #allocation4 [shape = 's32[1]{0}', space=sflag, size = 0x4, scoped, tag = 'scoped memory for tpu_custom_call.1']
    #allocation5 [shape = 'u8[8192]{0}', space=vmem, size = 0x2000, scoped, tag = 'input window, operand 1, single buffered']
    #allocation6 [shape = 's32[1]{0}', space=sflag, size = 0x4, scoped, tag = 'scoped memory for tpu_custom_call.1']
    #allocation7 [shape = 'u8[4096]{0}', space=vmem, size = 0x1000, scoped, tag = 'output window, operand 0, single buffered']
    %7 = vsyncpa [#allocation3], 0
    %8 = vsyncpa [#allocation6], 0
    %9 = vsyncpa [#allocation4], 0
    // Predicated region
    $region2: #{tpu_custom_call.1} parent=1 // pred_check
      _
    $region3: #{tpu_custom_call.1} parent=1 // pred_check_branch
      %11 = sbr.rel (0) target = $region5
    $region4: #{tpu_custom_call.1} parent=1 // pred_region
      %s12 = sadd.s32 0, 0
      %s13 = smul.u32 2, %s12
      %s15 = ssub.s32 256, 256
      %16 = vsyncadd [#allocation3], %s15
      %s17 = smul.addr %s13, 128
      %s18 = scalar_lea.hbm %s0, %s17
      %s20 = sshll.u32 [#allocation2], 4
      %s21 = int_to_ptr.vmem [resolvable:$true] %s20
      %23 = dma.hbm_to_vmem [thread:$0]  %s18, 256, %s21, [#allocation3]
    $region5: #{tpu_custom_call.1} parent=1 // pred_fallthru
      _
    // Predicated region
    $region6: #{tpu_custom_call.1} parent=1 // pred_check
      _
    $region7: #{tpu_custom_call.1} parent=1 // pred_check_branch
      %25 = sbr.rel (0) target = $region9
    $region8: #{tpu_custom_call.1} parent=1 // pred_region
      %s26 = sadd.s32 0, 0
      %s27 = smul.u32 2, %s26
      %s29 = ssub.s32 256, 256
      %30 = vsyncadd [#allocation6], %s29
      %s31 = smul.addr %s27, 128
      %s32 = scalar_lea.hbm %s1, %s31
      %s34 = sshll.u32 [#allocation5], 4
      %s35 = int_to_ptr.vmem [resolvable:$true] %s34
      %37 = dma.hbm_to_vmem [thread:$0]  %s32, 256, %s35, [#allocation6]
    $region9: #{tpu_custom_call.1} parent=1 // pred_fallthru
      _
    // Predicated region
    $region10: #{tpu_custom_call.1} parent=1 // pred_check
      _
    $region11: #{tpu_custom_call.1} parent=1 // pred_check_branch
      %39 = sbr.rel (0) target = $region13
    $region12: #{tpu_custom_call.1} parent=1 // pred_region
      %40 = dma.done [#allocation3], 256
    $region13: #{tpu_custom_call.1} parent=1 // pred_fallthru
      _
    // Predicated region
    $region14: #{tpu_custom_call.1} parent=1 // pred_check
      _
    $region15: #{tpu_custom_call.1} parent=1 // pred_check_branch
      %42 = sbr.rel (0) target = $region17
    $region16: #{tpu_custom_call.1} parent=1 // pred_region
      %43 = dma.done [#allocation6], 256
    $region17: #{tpu_custom_call.1} parent=1 // pred_fallthru
      _
    %s44 = sadd.s32 0, 0
    %s45 = smul.u32 2, %s44
    %s46 = sadd.s32 0, 0
    %s47 = smul.u32 2, %s46
    %p48 = scmp.eq.s32.totalorder 0, 0
    // Predicated region
    $region18: #{tpu_custom_call.1} parent=1 // pred_check
      %p49 = pneg %p48
    $region19: #{tpu_custom_call.1} parent=1 // pred_check_branch
      %51 = sbr.rel (%p49) target = $region21
    $region20: #{tpu_custom_call.1} parent=1 // pred_region
      %52 = vst [vmem:[#allocation7] sm:$0xff] 0.0
    $region21: #{tpu_custom_call.1} parent=1 // pred_fallthru
      _
    %v53 = vld [vmem:[#allocation2] sm:$0xff]
    %v54 = vld [vmem:[#allocation5] sm:$0xff]
    %v55 = vsub.f32 %v53, %v54
    %v56 = vmul.f32 %v55, %v55
    %v57 = vld [vmem:[#allocation7] sm:$0xff]
    %v58 = vadd.f32 %v57, %v56
    %59 = vst [vmem:[#allocation7] sm:$0xff] %v58
    %v60 = vld [vmem:[#allocation2 + $0x8] sm:$0xff]
    %v61 = vld [vmem:[#allocation5 + $0x8] sm:$0xff]
    %v62 = vsub.f32 %v60, %v61
    %v63 = vmul.f32 %v62, %v62
    %v64 = vld [vmem:[#allocation7] sm:$0xff]
    %v65 = vadd.f32 %v64, %v63
    %66 = vst [vmem:[#allocation7] sm:$0xff] %v65
    // Predicated region
    $region22: #{tpu_custom_call.1} parent=1 // pred_check
      _
    $region23: #{tpu_custom_call.1} parent=1 // pred_check_branch
      %68 = sbr.rel (0) target = $region25
    $region24: #{tpu_custom_call.1} parent=1 // pred_region
      %s70 = ssub.s32 128, 128
      %71 = vsyncadd [#allocation4], %s70
      %s73 = sshll.u32 [#allocation7], 4
      %s74 = int_to_ptr.vmem [resolvable:$true] %s73
      %76 = dma.vmem_to_hbm [thread:$0]  %s74, 128, %s2, [#allocation4]
    $region25: #{tpu_custom_call.1} parent=1 // pred_fallthru
      _
    // Predicated region
    $region26: #{tpu_custom_call.1} parent=1 // pred_check
      _
    $region27: #{tpu_custom_call.1} parent=1 // pred_check_branch
      %78 = sbr.rel (0) target = $region29
    $region28: #{tpu_custom_call.1} parent=1 // pred_region
      %79 = dma.done [#allocation4], 128
    $region29: #{tpu_custom_call.1} parent=1 // pred_fallthru
      _
    %80 = vsyncpa [#allocation3], 1
    %81 = vsyncpa [#allocation6], 1
    %82 = vsyncpa [#allocation4], 1

</llo_original>
